<compile_context>
chip_gen: v5e
topology: v5e:2x2
jax: 0.10.0
libtpu: 0.0.40
codegen_flags: <defaults>
</compile_context>

<pallas_src>
import jax
import jax.numpy as jnp
from jax import lax
from jax.experimental import pallas as pl
from jax.experimental.pallas import tpu as pltpu


def _round_up(x: int, m: int) -> int:
    return (x + m - 1) // m * m


def _largest_divisor_tile(dim: int, target: int, align: int) -> int:
    """Largest multiple of `align`, <= target, that divides `dim` (dim % align == 0)."""
    t = max(align, (min(target, dim) // align) * align)
    while dim % t:
        t -= align
    return t


def _vmem_cap_bytes() -> int:
    try:
        return int(pltpu.get_tpu_info().vmem_capacity_bytes)
    except Exception:
        return 64 << 20  # conservative fallback (v7x per-TC VMEM)


# --------------------------------------------------------------------------
# Kernels
# --------------------------------------------------------------------------
def _linear_acc_kernel(x_ref, w_ref, b_ref, o_ref, acc_ref):
    """One (i, j, k) step of y = x @ W_km + b with K split over grid axis 2.

    x_ref:   (tm, tk)   activation tile
    w_ref:   (tk, tn)   K-major weight tile (no per-tile transpose needed)
    b_ref:   (1,  tn)   bias tile
    o_ref:   (tm, tn)   output tile (written on the last K step)
    acc_ref: (tm, tn)   f32 accumulator (initialized with the bias at k == 0)
    """
    k = pl.program_id(2)

    @pl.when(k == 0)
    def _():
        acc_ref[...] = jnp.broadcast_to(
            b_ref[...].astype(jnp.float32), acc_ref.shape)

    acc_ref[...] += lax.dot_general(
        x_ref[...], w_ref[...],
        dimension_numbers=(((1,), (0,)), ((), ())),
        preferred_element_type=jnp.float32,
    )

    @pl.when(k == pl.num_programs(2) - 1)
    def _():
        o_ref[...] = acc_ref[...].astype(o_ref.dtype)


def _linear_fullk_kernel(x_ref, w_ref, b_ref, o_ref):
    """Collapsed-K variant: whole contraction in one MXU pass, no scratch."""
    acc = lax.dot_general(
        x_ref[...], w_ref[...],
        dimension_numbers=(((1,), (0,)), ((), ())),
        preferred_element_type=jnp.float32,
    )
    o_ref[...] = (acc + b_ref[...].astype(jnp.float32)).astype(o_ref.dtype)


# --------------------------------------------------------------------------
# Load-time weight preparation (do this ONCE per nn.Linear)
# --------------------------------------------------------------------------
def prepare_linear_params(weight, bias, *, dtype=None):
    """PyTorch nn.Linear weight [D, E], bias [D] -> (K-major padded weight
    [K_pad, N_pad], padded bias [1, N_pad], D, E).  Optional downcast
    (bf16 recommended for the real decoder)."""
    D, E = weight.shape
    assert bias.shape == (D,), bias.shape
    if dtype is not None:
        weight = weight.astype(dtype)
        bias = bias.astype(dtype)
    K_pad = _round_up(E, 128)
    N_pad = _round_up(D, 128)
    w_km = jnp.pad(weight.T, ((0, K_pad - E), (0, N_pad - D)))
    b2d = jnp.pad(bias.reshape(1, D), ((0, 0), (0, N_pad - D)))
    return w_km, b2d, D, E


# --------------------------------------------------------------------------
# Projection wrapper
# --------------------------------------------------------------------------
def linear_projection_prepared(x, w_km, b2d, out_features, in_features, *,
                               tm=None, tn=None, tk=None):
    """y = x @ W^T + b with W already in prepared K-major padded layout."""
    *lead, E = x.shape
    assert E == in_features, (E, in_features)
    K_pad, N_pad = w_km.shape

    x2d = x.reshape(-1, E)
    M = x2d.shape[0]

    x_bytes = jnp.dtype(x2d.dtype).itemsize
    w_bytes = jnp.dtype(w_km.dtype).itemsize
    o_bytes = x_bytes
    b_bytes = jnp.dtype(b2d.dtype).itemsize

    vmem_cap = _vmem_cap_bytes()
    budget = int(0.6 * vmem_cap)          # leave room for Mosaic internals

    # Generation-aware tile targets: bigger on 128 MiB parts (v5e/v6e).
    big_vmem = vmem_cap >= (96 << 20)
    tm = tm if tm is not None else (1024 if big_vmem else 512)
    tn = tn if tn is not None else (1024 if big_vmem else 512)

    def footprint(tm_, tn_, tk_, with_acc):
        f = (2 * tm_ * tk_ * x_bytes        # double-buffered activations
             + 2 * tk_ * tn_ * w_bytes      # double-buffered weights
             + 2 * tm_ * tn_ * o_bytes      # double-buffered output
             + 2 * tn_ * b_bytes)           # bias
        if with_acc:
            f += tm_ * tn_ * 4              # f32 accumulator
        return f + (2 << 20)                # headroom for internal scratch

    # --- tm: adaptive so awkward M is not rounded up to a whole big tile ---
    M_pad8 = _round_up(max(M, 8), 8)
    tm_eff = min(_round_up(tm, 8), M_pad8)
    grid_m = pl.cdiv(M_pad8, tm_eff)
    tm_eff = _round_up(pl.cdiv(M_pad8, grid_m), 8)

    # --- tn: divisor of padded N; keep >= 2 j-blocks when possible (v7x 2 TCs)
    tn_eff = _largest_divisor_tile(N_pad, tn, 128)
    if N_pad // tn_eff < 2 and N_pad >= 256:
        tn_eff = _largest_divisor_tile(N_pad, N_pad // 2, 128)

    # --- tk: collapse K entirely whenever it fits (no scratch, no k-steps) ---
    if tk is None:
        if footprint(tm_eff, tn_eff, K_pad, with_acc=False) <= budget:
            tk_eff, use_acc = K_pad, False
        else:
            tk_eff = _largest_divisor_tile(K_pad, 1024, 128)
            use_acc = tk_eff < K_pad
    else:
        tk_eff = _largest_divisor_tile(K_pad, tk, 128)
        use_acc = tk_eff < K_pad

    # --- shrink to fit VMEM budget: tk first, then tn, then tm -------------
    while footprint(tm_eff, tn_eff, tk_eff, use_acc) > budget:
        if tk_eff > 128:
            tk_eff = _largest_divisor_tile(K_pad, tk_eff // 2, 128)
            use_acc = tk_eff < K_pad
        elif tn_eff > 128:
            tn_eff = _largest_divisor_tile(N_pad, tn_eff // 2, 128)
        elif tm_eff > 8:
            tm_eff = max(8, _round_up(tm_eff // 2, 8))
        else:
            break

    grid_m = pl.cdiv(M_pad8, tm_eff)
    tm_eff = _round_up(pl.cdiv(M_pad8, grid_m), 8)
    M_pad = grid_m * tm_eff
    grid_n = N_pad // tn_eff
    grid_k = K_pad // tk_eff

    # Pad activations per call (weights/bias were padded once at load time).
    if (M_pad, K_pad) != (M, E):
        x2d = jnp.pad(x2d, ((0, M_pad - M), (0, K_pad - E)))

    vmem_limit = int(min(
        max(2 * footprint(tm_eff, tn_eff, tk_eff, use_acc), 16 << 20),
        int(0.85 * vmem_cap)))

    cost = pl.CostEstimate(
        flops=2 * M_pad * K_pad * N_pad,
        transcendentals=0,
        bytes_accessed=(grid_n * M_pad * K_pad * x_bytes
                        + grid_m * K_pad * N_pad * w_bytes
                        + N_pad * b_bytes
                        + M_pad * N_pad * o_bytes),
    )

    if use_acc:
        out_padded = pl.pallas_call(
            _linear_acc_kernel,
            out_shape=jax.ShapeDtypeStruct((M_pad, N_pad), x.dtype),
            grid_spec=pltpu.PrefetchScalarGridSpec(
                num_scalar_prefetch=0,
                grid=(grid_m, grid_n, grid_k),
                in_specs=[
                    pl.BlockSpec((tm_eff, tk_eff), lambda i, j, k: (i, k)),
                    pl.BlockSpec((tk_eff, tn_eff), lambda i, j, k: (k, j)),
                    pl.BlockSpec((1, tn_eff), lambda i, j, k: (0, j)),
                ],
                out_specs=pl.BlockSpec((tm_eff, tn_eff), lambda i, j, k: (i, j)),
                scratch_shapes=[pltpu.VMEM((tm_eff, tn_eff), jnp.float32)],
            ),
            compiler_params=pltpu.CompilerParams(
                dimension_semantics=("parallel", "parallel", "arbitrary"),
                vmem_limit_bytes=vmem_limit,
            ),
            cost_estimate=cost,
        )(x2d, w_km, b2d)
    else:
        out_padded = pl.pallas_call(
            _linear_fullk_kernel,
            out_shape=jax.ShapeDtypeStruct((M_pad, N_pad), x.dtype),
            grid_spec=pltpu.PrefetchScalarGridSpec(
                num_scalar_prefetch=0,
                grid=(grid_m, grid_n),
                in_specs=[
                    pl.BlockSpec((tm_eff, K_pad), lambda i, j: (i, 0)),
                    pl.BlockSpec((K_pad, tn_eff), lambda i, j: (0, j)),
                    pl.BlockSpec((1, tn_eff), lambda i, j: (0, j)),
                ],
                out_specs=pl.BlockSpec((tm_eff, tn_eff), lambda i, j: (i, j)),
            ),
            compiler_params=pltpu.CompilerParams(
                dimension_semantics=("parallel", "parallel"),
                vmem_limit_bytes=vmem_limit,
            ),
            cost_estimate=cost,
        )(x2d, w_km, b2d)

    return out_padded[:M, :out_features].reshape(*lead, out_features)


def linear_projection(x, weight, bias, **kw):
    """Convenience path: PyTorch nn.Linear semantics, prep done inline.
    (In the real decoder, call prepare_linear_params once at load time.)"""
    w_km, b2d, D, E = prepare_linear_params(weight, bias)
    return linear_projection_prepared(x, w_km, b2d, D, E, **kw)


if __name__ == "__main__":
    key = jax.random.PRNGKey(0)
    kx, kw, kb, kx2, kw2, kb2, kx3, kw3, kb3 = jax.random.split(key, 9)

    # --- Test 1: small decoder-projection shapes, f32, collapsed-K path ----
    batch, seq, in_f, out_f = 2, 8, 32, 64
    x = jax.random.normal(kx, (batch, seq, in_f), dtype=jnp.float32)
    bound = 1.0 / (in_f ** 0.5)
    w = jax.random.uniform(kw, (out_f, in_f), minval=-bound, maxval=bound,
                           dtype=jnp.float32)
    b = jax.random.uniform(kb, (out_f,), minval=-bound, maxval=bound,
                           dtype=jnp.float32)
    out = jax.block_until_ready(linear_projection(x, w, b))
    ref = x @ w.T + b
    assert out.shape == (batch, seq, out_f), out.shape
    assert jnp.allclose(out, ref, atol=1e-4, rtol=1e-4), \
        float(jnp.max(jnp.abs(out - ref)))

    # --- Test 2: force small tiles so the K-split accumulator path runs ----
    M2, in2, out2 = 16, 384, 256
    x2 = jax.random.normal(kx2, (M2, in2), dtype=jnp.float32)
    bound2 = 1.0 / (in2 ** 0.5)
    w2 = jax.random.uniform(kw2, (out2, in2), minval=-bound2, maxval=bound2,
                            dtype=jnp.float32)
    b2 = jax.random.uniform(kb2, (out2,), minval=-bound2, maxval=bound2,
                            dtype=jnp.float32)
    out2_ = jax.block_until_ready(
        linear_projection(x2, w2, b2, tm=16, tn=128, tk=128))
    ref2 = x2 @ w2.T + b2
    assert jnp.allclose(out2_, ref2, atol=1e-3, rtol=1e-3), \
        float(jnp.max(jnp.abs(out2_ - ref2)))

    # --- Test 3: bf16 operands (the dtype the real Mistral decoder runs in)
    in3, out3 = 512, 384
    x3 = jax.random.normal(kx3, (2, 8, in3), dtype=jnp.float32)
    bound3 = 1.0 / (in3 ** 0.5)
    w3 = jax.random.uniform(kw3, (out3, in3), minval=-bound3, maxval=bound3,
                            dtype=jnp.float32)
    b3 = jax.random.uniform(kb3, (out3,), minval=-bound3, maxval=bound3,
                            dtype=jnp.float32)
    w_km3, b2d3, D3, E3 = prepare_linear_params(w3, b3, dtype=jnp.bfloat16)
    out3_ = jax.block_until_ready(
        linear_projection_prepared(x3.astype(jnp.bfloat16), w_km3, b2d3, D3, E3))
    ref3 = (x3.astype(jnp.bfloat16).astype(jnp.float32)
            @ w3.astype(jnp.bfloat16).astype(jnp.float32).T
            + b3.astype(jnp.bfloat16).astype(jnp.float32))
    assert out3_.shape == (2, 8, out3), out3_.shape
    assert jnp.allclose(out3_.astype(jnp.float32), ref3, atol=3e-2, rtol=3e-2), \
        float(jnp.max(jnp.abs(out3_.astype(jnp.float32) - ref3)))

    print("KERNEL_OK")
</pallas_src>

<mosaic_0001>
module attributes {stable_mosaic.version = 11 : i64} {
  func.func @_linear_fullk_kernel(%arg0: i32, %arg1: i32, %arg2: memref<16x128xf32, #tpu.memory_space<vmem>>, %arg3: memref<128x128xf32, #tpu.memory_space<vmem>>, %arg4: memref<1x128xf32, #tpu.memory_space<vmem>>, %arg5: memref<16x128xf32, #tpu.memory_space<vmem>>) attributes {dimension_semantics = [#tpu.dimension_semantics<parallel>, #tpu.dimension_semantics<parallel>], iteration_bounds = array<i64: 1, 1>, scalar_prefetch = 0 : i64, scratch_operands = 0 : i64, tpu.core_type = #tpu.core_type<tc>, window_params = [{transform_indices = @transform_0, window_bounds = array<i64: 16, 128>}, {transform_indices = @transform_1, window_bounds = array<i64: 128, 128>}, {transform_indices = @transform_2, window_bounds = array<i64: 1, 128>}, {transform_indices = @transform_3, window_bounds = array<i64: 16, 128>}]} {
    %c0 = arith.constant 0 : index
    %c0_0 = arith.constant 0 : index
    %0 = vector.load %arg2[%c0, %c0_0] : memref<16x128xf32, #tpu.memory_space<vmem>>, vector<16x128xf32>
    %c0_1 = arith.constant 0 : index
    %c0_2 = arith.constant 0 : index
    %1 = vector.load %arg3[%c0_1, %c0_2] : memref<128x128xf32, #tpu.memory_space<vmem>>, vector<128x128xf32>
    %cst = arith.constant dense<0.000000e+00> : vector<16x128xf32>
    %2 = tpu.matmul %0, %1, %cst {dimension_numbers = #tpu.dot_dimension_numbers<[1], [0], [0], [1], [0, 0, 1, 1], [], []>} : vector<16x128xf32>, vector<128x128xf32>, vector<16x128xf32> -> vector<16x128xf32>
    %c0_3 = arith.constant 0 : index
    %c0_4 = arith.constant 0 : index
    %3 = vector.load %arg4[%c0_3, %c0_4] : memref<1x128xf32, #tpu.memory_space<vmem>>, vector<1x128xf32>
    %4 = vector.broadcast %3 : vector<1x128xf32> to vector<16x128xf32>
    %5 = arith.addf %2, %4 : vector<16x128xf32>
    %c0_5 = arith.constant 0 : index
    %c0_6 = arith.constant 0 : index
    %6 = vector.load %arg5[%c0_5, %c0_6] : memref<16x128xf32, #tpu.memory_space<vmem>>, vector<16x128xf32>
    tpu.vector_store %arg5[%c0_5, %c0_6], %5 {strides = array<i32>} : memref<16x128xf32, #tpu.memory_space<vmem>>, vector<16x128xf32>,
    return
  }
  func.func @transform_0(%arg0: i32, %arg1: i32) -> (i32, i32) {
    %c0_i32 = arith.constant 0 : i32
    %c0_i32_0 = arith.constant 0 : i32
    return %arg0, %c0_i32 : i32, i32
  }
  func.func @transform_1(%arg0: i32, %arg1: i32) -> (i32, i32) {
    %c0_i32 = arith.constant 0 : i32
    %c0_i32_0 = arith.constant 0 : i32
    return %c0_i32, %arg1 : i32, i32
  }
  func.func @transform_2(%arg0: i32, %arg1: i32) -> (i32, i32) {
    %c0_i32 = arith.constant 0 : i32
    %c0_i32_0 = arith.constant 0 : i32
    return %c0_i32, %arg1 : i32, i32
  }
  func.func @transform_3(%arg0: i32, %arg1: i32) -> (i32, i32) {
    %c0_i32 = arith.constant 0 : i32
    return %arg0, %arg1 : i32, i32
  }
}

</mosaic_0001>

<llo_original>
// kernel: tpu_custom_call.1
$region0: #{tpu_custom_call.1}
  #allocation0 [shape = 'u32[]', space=smem, size = 0x4, offset = 0x4, fixed_abs, tag = 'smem constant byte address 0x4 - core index']
  #allocation1 [shape = 'u32[72,128]{1,0:T(1,128)}', space=vmem, size = 0x9000, scoped, tag = 'internal scratch']
  %s0 = inlined_call_operand.hbm [shape: f32[16,128], index: 0, kind: input, shape index: {}]
  %s1 = inlined_call_operand.hbm [shape: f32[128,128], index: 1, kind: input, shape index: {}]
  %s2 = inlined_call_operand.vmem [shape: f32[1,128], index: 2, kind: input, shape index: {}]
  %s3 = inlined_call_operand.hbm [shape: f32[16,128], index: 3, kind: output, shape index: {}]
  %s4 = sld [smem:[#allocation0]]
  $region30: #{tpu_custom_call.1} parent=0
    _
  %s6 = ssub.s32 1, %s4
  %s7 = scalar_select 0, %s6, %s4
  $region1: #{tpu_custom_call.1} parent=0
    #allocation2 [shape = 'u8[8192]{0}', space=vmem, size = 0x2000, scoped, tag = 'input window, operand 0, single buffered']
    #allocation3 [shape = 's32[1]{0}', space=sflag, size = 0x4, scoped, tag = 'scoped memory for tpu_custom_call.1']
    #allocation4 [shape = 's32[1]{0}', space=sflag, size = 0x4, scoped, tag = 'scoped memory for tpu_custom_call.1']
    #allocation5 [shape = 'u8[65536]{0}', space=vmem, size = 0x10000, scoped, tag = 'input window, operand 1, single buffered']
    #allocation6 [shape = 's32[1]{0}', space=sflag, size = 0x4, scoped, tag = 'scoped memory for tpu_custom_call.1']
    #allocation7 [shape = 'u8[8192]{0}', space=vmem, size = 0x2000, scoped, tag = 'output window, operand 0, single buffered']
    %8 = vsyncpa [#allocation3], 0
    %9 = vsyncpa [#allocation6], 0
    %10 = vsyncpa [#allocation4], 0
    // Predicated region
    $region2: #{tpu_custom_call.1} parent=1 // pred_check
      _
    $region3: #{tpu_custom_call.1} parent=1 // pred_check_branch
      %12 = sbr.rel (0) target = $region5
    $region4: #{tpu_custom_call.1} parent=1 // pred_region
      %14 = vsyncadd [#allocation3], 0
      %s15 = sshll.u32 %s0, 4
      %s16 = int_to_ptr.hbm [resolvable:$true] %s15
      %s17 = sshll.u32 [#allocation2], 4
      %s18 = int_to_ptr.vmem [resolvable:$true] %s17
      %23 = dma.hbm_to_vmem [thread:$0]  %s16, 256, %s18, [#allocation3], 128, 128, 8
    $region5: #{tpu_custom_call.1} parent=1 // pred_fallthru
      _
    // Predicated region
    $region6: #{tpu_custom_call.1} parent=1 // pred_check
      _
    $region7: #{tpu_custom_call.1} parent=1 // pred_check_branch
      %25 = sbr.rel (0) target = $region9
    $region8: #{tpu_custom_call.1} parent=1 // pred_region
      %27 = vsyncadd [#allocation6], 0
      %s28 = sshll.u32 %s1, 4
      %s29 = int_to_ptr.hbm [resolvable:$true] %s28
      %s30 = sshll.u32 [#allocation5], 4
      %s31 = int_to_ptr.vmem [resolvable:$true] %s30
      %36 = dma.hbm_to_vmem [thread:$0]  %s29, 2048, %s31, [#allocation6], 128, 128, 8
    $region9: #{tpu_custom_call.1} parent=1 // pred_fallthru
      _
    // Predicated region
    $region10: #{tpu_custom_call.1} parent=1 // pred_check
      _
    $region11: #{tpu_custom_call.1} parent=1 // pred_check_branch
      %38 = sbr.rel (0) target = $region13
    $region12: #{tpu_custom_call.1} parent=1 // pred_region
      _
    $region13: #{tpu_custom_call.1} parent=1 // pred_fallthru
      _
    // Predicated region
    $region14: #{tpu_custom_call.1} parent=1 // pred_check
      _
    $region15: #{tpu_custom_call.1} parent=1 // pred_check_branch
      %40 = sbr.rel (0) target = $region17
    $region16: #{tpu_custom_call.1} parent=1 // pred_region
      %42 = dma.done [#allocation3], 256
    $region17: #{tpu_custom_call.1} parent=1 // pred_fallthru
      _
    // Predicated region
    $region18: #{tpu_custom_call.1} parent=1 // pred_check
      _
    $region19: #{tpu_custom_call.1} parent=1 // pred_check_branch
      %44 = sbr.rel (0) target = $region21
    $region20: #{tpu_custom_call.1} parent=1 // pred_region
      %46 = dma.done [#allocation6], 2048
    $region21: #{tpu_custom_call.1} parent=1 // pred_fallthru
      _
    %v47 = vld [vmem:[#allocation2] sm:$0xff]
    %v48 = vld [vmem:[#allocation2 + $0x8] sm:$0xff]
    %v49 = vld [vmem:[#allocation5] sm:$0xff]
    %v50 = vld [vmem:[#allocation5 + $0x8] sm:$0xff]
    %v51 = vld [vmem:[#allocation5 + $0x10] sm:$0xff]
    %v52 = vld [vmem:[#allocation5 + $0x18] sm:$0xff]
    %v53 = vld [vmem:[#allocation5 + $0x20] sm:$0xff]
    %v54 = vld [vmem:[#allocation5 + $0x28] sm:$0xff]
    %v55 = vld [vmem:[#allocation5 + $0x30] sm:$0xff]
    %v56 = vld [vmem:[#allocation5 + $0x38] sm:$0xff]
    %v57 = vld [vmem:[#allocation5 + $0x40] sm:$0xff]
    %v58 = vld [vmem:[#allocation5 + $0x48] sm:$0xff]
    %v59 = vld [vmem:[#allocation5 + $0x50] sm:$0xff]
    %v60 = vld [vmem:[#allocation5 + $0x58] sm:$0xff]
    %v61 = vld [vmem:[#allocation5 + $0x60] sm:$0xff]
    %v62 = vld [vmem:[#allocation5 + $0x68] sm:$0xff]
    %v63 = vld [vmem:[#allocation5 + $0x70] sm:$0xff]
    %v64 = vld [vmem:[#allocation5 + $0x78] sm:$0xff]
    %v65 = vld [vmem:[%s2] sm:$0x1]
    %v67 = vperm.slane %v65, 0
    %69 = vmatpush.msra.mxu0 %v64
    %70 = vmatpush.msra.mxu0 %v63
    %71 = vmatpush.msra.mxu0 %v62
    %72 = vmatpush.msra.mxu0 %v61
    %73 = vmatpush.msra.mxu0 %v60
    %74 = vmatpush.msra.mxu0 %v59
    %75 = vmatpush.msra.mxu0 %v58
    %76 = vmatpush.msra.mxu0 %v57
    %77 = vmatpush.msra.mxu0 %v56
    %78 = vmatpush.msra.mxu0 %v55
    %79 = vmatpush.msra.mxu0 %v54
    %80 = vmatpush.msra.mxu0 %v53
    %81 = vmatpush.msra.mxu0 %v52
    %82 = vmatpush.msra.mxu0 %v51
    %83 = vmatpush.msra.mxu0 %v50
    %84 = vmatpush.msra.mxu0 %v49
    %85 = vmatmul.f32.gmra.mxu0 %v47
    %v86 = vpop.f32.mrf.mxu0
    %v87 = vadd.f32 %v67, %v86
    %88 = vmatmul.f32.gmra.mxu0 %v48
    %v89 = vpop.f32.mrf.mxu0
    %v90 = vadd.f32 %v67, %v89
    %91 = vdwg.mxu0
    %92 = vst [vmem:[#allocation7] sm:$0xff] %v87
    %93 = vst [vmem:[#allocation7 + $0x8] sm:$0xff] %v90
    // Predicated region
    $region22: #{tpu_custom_call.1} parent=1 // pred_check
      _
    $region23: #{tpu_custom_call.1} parent=1 // pred_check_branch
      %95 = sbr.rel (0) target = $region25
    $region24: #{tpu_custom_call.1} parent=1 // pred_region
      %97 = vsyncadd [#allocation4], 0
      %s98 = sshll.u32 [#allocation7], 4
      %s99 = int_to_ptr.vmem [resolvable:$true] %s98
      %s100 = sshll.u32 %s3, 4
      %s101 = int_to_ptr.hbm [resolvable:$true] %s100
      %106 = dma.vmem_to_hbm [thread:$0]  %s99, 256, %s101, [#allocation4], 128, 128, 8
    $region25: #{tpu_custom_call.1} parent=1 // pred_fallthru
      _
    // Predicated region
    $region26: #{tpu_custom_call.1} parent=1 // pred_check
      _
    $region27: #{tpu_custom_call.1} parent=1 // pred_check_branch
      %108 = sbr.rel (0) target = $region29
    $region28: #{tpu_custom_call.1} parent=1 // pred_region
      %110 = dma.done [#allocation4], 256
    $region29: #{tpu_custom_call.1} parent=1 // pred_fallthru
      _
    %111 = vsyncpa [#allocation3], 1
    %112 = vsyncpa [#allocation6], 1
    %113 = vsyncpa [#allocation4], 1

</llo_original>
